<compile_context>
chip_gen: v7x
topology: tpu7x:2x2x1
jax: 0.10.0
libtpu: 0.0.40
codegen_flags: <defaults>
</compile_context>

<pallas_src>
import functools

import jax
import jax.numpy as jnp
from jax.experimental import pallas as pl
from jax.experimental.pallas import tpu as pltpu


def _cdiv(a, b):
    return -(-a // b)


def _round_up(x, m):
    return ((x + m - 1) // m) * m


def _vmem_capacity_bytes():
    try:
        cap = int(pltpu.get_tpu_info().vmem_capacity_bytes)
    except Exception:
        cap = 0
    if cap <= 0:
        cap = 64 * 1024 * 1024  # conservative: v7x per-TensorCore VMEM
    return cap


def _apply_act(y, act):
    if act == "relu":
        return jnp.maximum(y, 0.0)
    if act == "lrelu":
        return jnp.where(y >= 0.0, y, 0.2 * y)
    if act == "tanh":
        return jnp.tanh(y)
    return y


# ----------------------------------------------------------------------------
# Single-pass path: each grid step owns (tr, HW) full rows.
# ----------------------------------------------------------------------------
def _adain_kernel(x_ref, w_ref, b_ref, o_ref, *, eps, hw, act):
    x = x_ref[...].astype(jnp.float32)                  # (tr, HW)
    inv_n = jnp.float32(1.0 / hw)
    mean = jnp.sum(x, axis=-1, keepdims=True) * inv_n   # (tr, 1)
    xc = x - mean
    var = jnp.sum(xc * xc, axis=-1, keepdims=True) * inv_n
    inv_std = jax.lax.rsqrt(var + jnp.float32(eps))
    scale = inv_std * w_ref[...].astype(jnp.float32)    # (tr, 1)
    y = xc * scale + b_ref[...].astype(jnp.float32)
    o_ref[...] = _apply_act(y, act).astype(o_ref.dtype)


def _choose_row_tile(R, HW, sub, itemsize, bytes_per_row, budget, target_bytes):
    """Rows per tile + grid steps for the full-row path."""
    if R <= sub:
        return R, 1
    rows_max = (R // sub) * sub                          # largest sub-multiple <= R
    rows_cap = max(sub, int(budget // bytes_per_row) // sub * sub)
    rows_tgt = max(sub, int(target_bytes // max(1, HW * itemsize)) // sub * sub)
    rows = min(rows_cap, rows_tgt, rows_max)
    grid_n = _cdiv(R, rows)

    # v7x megacore: prefer >= 4 grid steps (per-core pipelining) and an even
    # step count (balanced across both TensorCores) when R allows.
    max_tiles = _cdiv(R, sub)
    want = min(max_tiles, max(grid_n, 4))
    if want % 2 == 1 and want + 1 <= max_tiles:
        want += 1
    rows2 = min(rows_max, max(sub, _round_up(_cdiv(R, want), sub)))
    g2 = _cdiv(R, rows2)
    if g2 >= grid_n:                                     # only ever shrink tiles
        rows, grid_n = rows2, g2
    if grid_n % 2 == 1 and grid_n > 1:
        for g in (grid_n + 1, grid_n - 1):
            if g < 2 or g > max_tiles:
                continue
            r_try = min(rows_max, max(sub, _round_up(_cdiv(R, g), sub)))
            if r_try > rows_cap:                         # stay inside VMEM budget
                continue
            if _cdiv(R, r_try) % 2 == 0:
                rows, grid_n = r_try, _cdiv(R, r_try)
                break
    return rows, grid_n


# ----------------------------------------------------------------------------
# Chunked two-phase path for very large H*W (full-row tile would not fit VMEM).
# Phase 1: accumulate per-row sums over column chunks -> scale/shift (R, 1).
# Phase 2: apply scale/shift chunk by chunk.
# ----------------------------------------------------------------------------
def _adain_stats_kernel(x_ref, w_ref, b_ref, scale_ref, shift_ref,
                        s1_ref, s2_ref, *, eps, hw, tc):
    j = pl.program_id(1)

    @pl.when(j == 0)
    def _init():
        s1_ref[...] = jnp.zeros_like(s1_ref)
        s2_ref[...] = jnp.zeros_like(s2_ref)

    x = x_ref[...].astype(jnp.float32)                   # (tr, tc)
    col = jax.lax.broadcasted_iota(jnp.int32, x.shape, 1) + j * tc
    xv = jnp.where(col < hw, x, 0.0)                     # mask ragged last chunk
    s1_ref[...] = s1_ref[...] + jnp.sum(xv, axis=-1, keepdims=True)
    s2_ref[...] = s2_ref[...] + jnp.sum(xv * xv, axis=-1, keepdims=True)

    @pl.when(j == pl.num_programs(1) - 1)
    def _finalize():
        inv_n = jnp.float32(1.0 / hw)
        mean = s1_ref[...] * inv_n
        var = jnp.maximum(s2_ref[...] * inv_n - mean * mean, 0.0)
        inv_std = jax.lax.rsqrt(var + jnp.float32(eps))
        scale = inv_std * w_ref[...].astype(jnp.float32)
        scale_ref[...] = scale
        shift_ref[...] = b_ref[...].astype(jnp.float32) - mean * scale


def _adain_apply_kernel(x_ref, scale_ref, shift_ref, o_ref, *, act):
    y = x_ref[...].astype(jnp.float32) * scale_ref[...] + shift_ref[...]
    o_ref[...] = _apply_act(y, act).astype(o_ref.dtype)


def _choose_chunk_tile(R, HW, sub, itemsize, budget, target_bytes):
    tr = R if R <= sub else sub
    bytes_per_col = tr * (4 * itemsize + 3 * 4)
    cols_cap = max(128, int(budget // bytes_per_col) // 128 * 128)
    cols_tgt = max(128, int(target_bytes // max(1, tr * itemsize)) // 128 * 128)
    tc = min(cols_cap, cols_tgt)
    if tc >= HW:
        tc = HW                                          # full dim always legal
    return tr, tc


def _adain_chunked(x2d, w2d, b2d, *, eps, act, tr, tc, vmem_limit):
    R, HW = x2d.shape
    nr, nc = _cdiv(R, tr), _cdiv(HW, tc)

    scale, shift = pl.pallas_call(
        functools.partial(_adain_stats_kernel, eps=eps, hw=HW, tc=tc),
        out_shape=(jax.ShapeDtypeStruct((R, 1), jnp.float32),
                   jax.ShapeDtypeStruct((R, 1), jnp.float32)),
        grid_spec=pltpu.PrefetchScalarGridSpec(
            num_scalar_prefetch=0,
            grid=(nr, nc),
            in_specs=[pl.BlockSpec((tr, tc), lambda i, j: (i, j)),
                      pl.BlockSpec((tr, 1), lambda i, j: (i, 0)),
                      pl.BlockSpec((tr, 1), lambda i, j: (i, 0))],
            out_specs=[pl.BlockSpec((tr, 1), lambda i, j: (i, 0)),
                       pl.BlockSpec((tr, 1), lambda i, j: (i, 0))],
            scratch_shapes=[pltpu.VMEM((tr, 1), jnp.float32),
                            pltpu.VMEM((tr, 1), jnp.float32)]),
        compiler_params=pltpu.CompilerParams(
            dimension_semantics=("parallel", "arbitrary"),
            vmem_limit_bytes=vmem_limit),
    )(x2d, w2d, b2d)

    out2d = pl.pallas_call(
        functools.partial(_adain_apply_kernel, act=act),
        out_shape=jax.ShapeDtypeStruct((R, HW), x2d.dtype),
        grid_spec=pltpu.PrefetchScalarGridSpec(
            num_scalar_prefetch=0,
            grid=(nr, nc),
            in_specs=[pl.BlockSpec((tr, tc), lambda i, j: (i, j)),
                      pl.BlockSpec((tr, 1), lambda i, j: (i, 0)),
                      pl.BlockSpec((tr, 1), lambda i, j: (i, 0))],
            out_specs=pl.BlockSpec((tr, tc), lambda i, j: (i, j))),
        compiler_params=pltpu.CompilerParams(
            dimension_semantics=("parallel", "parallel"),
            vmem_limit_bytes=vmem_limit),
    )(x2d, scale, shift)
    return out2d


# ----------------------------------------------------------------------------
# Public wrapper: AdaIN (+ fused activation) forward.
# ----------------------------------------------------------------------------
def adaptive_instance_norm_2d(x, weight, bias, *, eps=1e-5, act="none",
                              force_chunked=False, max_tile_bytes=2 * 1024 * 1024):
    """x: (B, C, H, W); weight/bias: (B*C,) externally-assigned gamma/beta."""
    B, C, H, W = x.shape
    R = B * C
    HW = H * W
    assert weight.shape == (R,) and bias.shape == (R,)

    itemsize = x.dtype.itemsize
    sub = max(8, 32 // itemsize)          # sublane multiple: 8 f32 / 16 bf16 / 32 int8

    x2d = x.reshape(R, HW)                # free reshapes; no padding, no copies
    w2d = weight.reshape(R, 1)
    b2d = bias.reshape(R, 1)

    # Per-TensorCore VMEM budget. v5e/v6e (128 MiB) can afford a larger
    # fraction; v7x (64 MiB, and get_tpu_info may report per-chip numbers)
    # stays conservative.
    cap = _vmem_capacity_bytes()
    if cap > 96 * 1024 * 1024:
        budget = int(cap * 0.70)
    else:
        budget = int(cap * 0.45)
    vmem_limit = int(min(cap, max(32 * 1024 * 1024, budget)))

    # Pipeline buffers (2 in + 2 out of x.dtype) + ~3 tile-sized f32 temporaries.
    bytes_per_row = HW * (4 * itemsize + 3 * 4)
    use_chunked = force_chunked or (min(R, sub) * bytes_per_row > budget)

    if use_chunked:
        tr, tc = _choose_chunk_tile(R, HW, sub, itemsize, budget, max_tile_bytes)
        out2d = _adain_chunked(x2d, w2d, b2d, eps=eps, act=act, tr=tr, tc=tc,
                               vmem_limit=vmem_limit)
    else:
        tr, grid_n = _choose_row_tile(R, HW, sub, itemsize, bytes_per_row,
                                      budget, max_tile_bytes)
        out2d = pl.pallas_call(
            functools.partial(_adain_kernel, eps=eps, hw=HW, act=act),
            out_shape=jax.ShapeDtypeStruct((R, HW), x.dtype),
            grid_spec=pltpu.PrefetchScalarGridSpec(
                num_scalar_prefetch=0,
                grid=(grid_n,),
                in_specs=[pl.BlockSpec((tr, HW), lambda i: (i, 0)),
                          pl.BlockSpec((tr, 1), lambda i: (i, 0)),
                          pl.BlockSpec((tr, 1), lambda i: (i, 0))],
                out_specs=pl.BlockSpec((tr, HW), lambda i: (i, 0))),
            compiler_params=pltpu.CompilerParams(
                dimension_semantics=("parallel",),
                vmem_limit_bytes=vmem_limit),
        )(x2d, w2d, b2d)

    return out2d.reshape(B, C, H, W)


# ----------------------------------------------------------------------------
# Pure-JAX reference (AdaIN, training-mode batch_norm semantics).
# ----------------------------------------------------------------------------
def _reference(x, weight, bias, eps=1e-5):
    B, C, H, W = x.shape
    xr = x.reshape(B * C, H * W).astype(jnp.float32)
    mean = xr.mean(axis=-1, keepdims=True)
    var = ((xr - mean) ** 2).mean(axis=-1, keepdims=True)
    y = (xr - mean) / jnp.sqrt(var + eps)
    y = y * weight.reshape(-1, 1) + bias.reshape(-1, 1)
    return y.reshape(B, C, H, W).astype(x.dtype)


if __name__ == "__main__":
    B, C, H, W = 2, 4, 16, 16
    eps = 1e-5

    key = jax.random.PRNGKey(0)
    kx, kw, kb = jax.random.split(key, 3)

    x = jax.random.normal(kx, (B, C, H, W), dtype=jnp.float32)
    # AdaIN-style externally assigned params, shape (B * num_features,).
    weight = 1.0 + 0.1 * jax.random.normal(kw, (B * C,), dtype=jnp.float32)
    bias = 0.1 * jax.random.normal(kb, (B * C,), dtype=jnp.float32)

    ref = _reference(x, weight, bias, eps=eps)

    # 1) main full-row path (norm only)
    out = jax.block_until_ready(adaptive_instance_norm_2d(x, weight, bias, eps=eps))
    assert out.shape == (B, C, H, W)
    assert jnp.allclose(out, ref, atol=5e-5, rtol=5e-5), \
        float(jnp.max(jnp.abs(out - ref)))

    # 2) fused ConvBlock activation stage (act='relu')
    out_relu = jax.block_until_ready(
        adaptive_instance_norm_2d(x, weight, bias, eps=eps, act="relu"))
    ref_relu = jnp.maximum(ref, 0.0)
    assert jnp.allclose(out_relu, ref_relu, atol=5e-5, rtol=5e-5)

    # 3) column-chunked two-phase path (forced, small chunks) for large-HW cases
    out_chunked = jax.block_until_ready(
        adaptive_instance_norm_2d(x, weight, bias, eps=eps,
                                  force_chunked=True, max_tile_bytes=4096))
    assert jnp.allclose(out_chunked, ref, atol=1e-4, rtol=1e-4)

    print("KERNEL_OK")
</pallas_src>

<mosaic_0001>
module attributes {stable_mosaic.version = 11 : i64} {
  func.func @_adain_kernel(%arg0: i32, %arg1: memref<8x256xf32, #tpu.memory_space<vmem>>, %arg2: memref<8x1xf32, #tpu.memory_space<vmem>>, %arg3: memref<8x1xf32, #tpu.memory_space<vmem>>, %arg4: memref<8x256xf32, #tpu.memory_space<vmem>>) attributes {dimension_semantics = [#tpu.dimension_semantics<parallel>], iteration_bounds = array<i64: 1>, scalar_prefetch = 0 : i64, scratch_operands = 0 : i64, tpu.core_type = #tpu.core_type<tc>, window_params = [{transform_indices = @transform_0, window_bounds = array<i64: 8, 256>}, {transform_indices = @transform_1, window_bounds = array<i64: 8, 1>}, {transform_indices = @transform_2, window_bounds = array<i64: 8, 1>}, {transform_indices = @transform_3, window_bounds = array<i64: 8, 256>}]} {
    %c0 = arith.constant 0 : index
    %c0_0 = arith.constant 0 : index
    %0 = vector.load %arg1[%c0, %c0_0] : memref<8x256xf32, #tpu.memory_space<vmem>>, vector<8x256xf32>
    %cst = arith.constant dense<0.000000e+00> : vector<8xf32>
    %1 = vector.multi_reduction <add>, %0, %cst [1] : vector<8x256xf32> to vector<8xf32>
    %2 = vector.shape_cast %1 : vector<8xf32> to vector<8x1xf32>
    %cst_1 = arith.constant 3.906250e-03 : f32
    %3 = vector.broadcast %cst_1 : f32 to vector<8x1xf32>
    %4 = arith.mulf %2, %3 : vector<8x1xf32>
    %5 = vector.broadcast %4 : vector<8x1xf32> to vector<8x256xf32>
    %6 = arith.subf %0, %5 : vector<8x256xf32>
    %7 = arith.mulf %6, %6 : vector<8x256xf32>
    %cst_2 = arith.constant dense<0.000000e+00> : vector<8xf32>
    %8 = vector.multi_reduction <add>, %7, %cst_2 [1] : vector<8x256xf32> to vector<8xf32>
    %9 = vector.shape_cast %8 : vector<8xf32> to vector<8x1xf32>
    %cst_3 = arith.constant 3.906250e-03 : f32
    %10 = vector.broadcast %cst_3 : f32 to vector<8x1xf32>
    %11 = arith.mulf %9, %10 : vector<8x1xf32>
    %cst_4 = arith.constant 9.99999974E-6 : f32
    %12 = vector.broadcast %cst_4 : f32 to vector<8x1xf32>
    %13 = arith.addf %11, %12 : vector<8x1xf32>
    %14 = math.rsqrt %13 : vector<8x1xf32>
    %c0_5 = arith.constant 0 : index
    %c0_6 = arith.constant 0 : index
    %15 = vector.load %arg2[%c0_5, %c0_6] : memref<8x1xf32, #tpu.memory_space<vmem>>, vector<8x1xf32>
    %16 = arith.mulf %14, %15 : vector<8x1xf32>
    %17 = vector.broadcast %16 : vector<8x1xf32> to vector<8x256xf32>
    %18 = arith.mulf %6, %17 : vector<8x256xf32>
    %c0_7 = arith.constant 0 : index
    %c0_8 = arith.constant 0 : index
    %19 = vector.load %arg3[%c0_7, %c0_8] : memref<8x1xf32, #tpu.memory_space<vmem>>, vector<8x1xf32>
    %20 = vector.broadcast %19 : vector<8x1xf32> to vector<8x256xf32>
    %21 = arith.addf %18, %20 : vector<8x256xf32>
    %c0_9 = arith.constant 0 : index
    %c0_10 = arith.constant 0 : index
    %22 = vector.load %arg4[%c0_9, %c0_10] : memref<8x256xf32, #tpu.memory_space<vmem>>, vector<8x256xf32>
    tpu.vector_store %arg4[%c0_9, %c0_10], %21 {strides = array<i32>} : memref<8x256xf32, #tpu.memory_space<vmem>>, vector<8x256xf32>,
    return
  }
  func.func @transform_0(%arg0: i32) -> (i32, i32) {
    %c0_i32 = arith.constant 0 : i32
    %c0_i32_0 = arith.constant 0 : i32
    return %arg0, %c0_i32 : i32, i32
  }
  func.func @transform_1(%arg0: i32) -> (i32, i32) {
    %c0_i32 = arith.constant 0 : i32
    %c0_i32_0 = arith.constant 0 : i32
    return %arg0, %c0_i32 : i32, i32
  }
  func.func @transform_2(%arg0: i32) -> (i32, i32) {
    %c0_i32 = arith.constant 0 : i32
    %c0_i32_0 = arith.constant 0 : i32
    return %arg0, %c0_i32 : i32, i32
  }
  func.func @transform_3(%arg0: i32) -> (i32, i32) {
    %c0_i32 = arith.constant 0 : i32
    %c0_i32_0 = arith.constant 0 : i32
    return %arg0, %c0_i32 : i32, i32
  }
}

</mosaic_0001>

<llo_original>
// kernel: tpu_custom_call.1
$region0: #{tpu_custom_call.1}
  #allocation0 [shape = 'u32[]', space=smem, size = 0x4, offset = 0x4, fixed_abs, tag = 'smem constant byte address 0x4 - core index']
  #allocation1 [shape = 'u32[144,128]{1,0:T(1,128)}', space=vmem, size = 0x12000, scoped, tag = 'internal scratch']
  %s0 = inlined_call_operand.vmem [shape: f32[8,256], index: 0, kind: input, shape index: {}]
  %s1 = inlined_call_operand.vmem [shape: f32[8,1], index: 1, kind: input, shape index: {}]
  %s2 = inlined_call_operand.vmem [shape: f32[8,1], index: 2, kind: input, shape index: {}]
  %s3 = inlined_call_operand.hbm [shape: f32[8,256], index: 3, kind: output, shape index: {}]
  %s4 = sld [smem:[#allocation0]]
  $region22: #{tpu_custom_call.1} parent=0
    _
  %s6 = ssub.s32 1, %s4
  %s7 = scalar_select 0, %s6, %s4
  $region1: #{tpu_custom_call.1} parent=0
    #allocation2 [shape = 'u8[8192]{0}', space=vmem, size = 0x2000, scoped, tag = 'output window, operand 0, single buffered']
    #allocation3 [shape = 's32[1]{0}', space=sflag, size = 0x4, scoped, tag = 'scoped memory for tpu_custom_call.1']
    %8 = vsyncpa [#allocation3], 0
    // Predicated region
    $region2: #{tpu_custom_call.1} parent=1 // pred_check
      _
    $region3: #{tpu_custom_call.1} parent=1 // pred_check_branch
      %10 = sbr.rel (0) target = $region5
    $region4: #{tpu_custom_call.1} parent=1 // pred_region
      _
    $region5: #{tpu_custom_call.1} parent=1 // pred_fallthru
      _
    // Predicated region
    $region6: #{tpu_custom_call.1} parent=1 // pred_check
      _
    $region7: #{tpu_custom_call.1} parent=1 // pred_check_branch
      %12 = sbr.rel (0) target = $region9
    $region8: #{tpu_custom_call.1} parent=1 // pred_region
      _
    $region9: #{tpu_custom_call.1} parent=1 // pred_fallthru
      _
    // Predicated region
    $region10: #{tpu_custom_call.1} parent=1 // pred_check
      _
    $region11: #{tpu_custom_call.1} parent=1 // pred_check_branch
      %14 = sbr.rel (0) target = $region13
    $region12: #{tpu_custom_call.1} parent=1 // pred_region
      _
    $region13: #{tpu_custom_call.1} parent=1 // pred_fallthru
      _
    %v15 = vld [vmem:[%s0] sm:$0xff]
    %v16 = vld [vmem:[%s0 + $0x8] sm:$0xff]
    %v17 = vadd.f32 %v15, %v16
    %18 = vadd.xlane.f32.xlu0 %v17
    %v19 = vpop.xlane.xlu0 %18
    %v20 = vmul.f32 %v19, 0.00390625
    %v21 = vsub.f32 %v15, %v20
    %v22 = vsub.f32 %v16, %v20
    %v23 = vmul.f32 %v21, %v21
    %v24 = vmul.f32 %v22, %v22
    %v25 = vadd.f32 %v23, %v24
    %26 = vadd.xlane.f32.xlu0 %v25
    %v27 = vpop.xlane.xlu0 %26
    %v28 = vmul.f32 %v27, 0.00390625
    %v29 = vadd.f32 %v28, 1e-05
    %v30 = vrsqrt.pop %v29
    %v31 = vld [vmem:[%s1] sm:$0xff]
    %v32 = vmul.f32 %v30, %v31
    %34 = vset.pattern.permute.xlu0 0
    %35 = vperm.xlu0 %34, %v32
    %v36 = vpop.permute.xlu0 %35
    %v38 = vmul.f32 %v21, %v36
    %v39 = vmul.f32 %v22, %v36
    %v40 = vld [vmem:[%s2] sm:$0xff]
    %42 = vset.pattern.permute.xlu0 0
    %43 = vperm.xlu0 %42, %v40
    %v44 = vpop.permute.xlu0 %43
    %v46 = vadd.f32 %v38, %v44
    %v47 = vadd.f32 %v39, %v44
    %48 = vst [vmem:[#allocation2] sm:$0xff] %v46
    %49 = vst [vmem:[#allocation2 + $0x8] sm:$0xff] %v47
    // Predicated region
    $region14: #{tpu_custom_call.1} parent=1 // pred_check
      _
    $region15: #{tpu_custom_call.1} parent=1 // pred_check_branch
      %51 = sbr.rel (0) target = $region17
    $region16: #{tpu_custom_call.1} parent=1 // pred_region
      %s53 = ssub.s32 256, 256
      %54 = vsyncadd [#allocation3], %s53
      %s56 = sshll.u32 [#allocation2], 4
      %s57 = int_to_ptr.vmem [resolvable:$true] %s56
      %59 = dma.vmem_to_hbm [thread:$0]  %s57, 256, %s3, [#allocation3]
    $region17: #{tpu_custom_call.1} parent=1 // pred_fallthru
      _
    // Predicated region
    $region18: #{tpu_custom_call.1} parent=1 // pred_check
      _
    $region19: #{tpu_custom_call.1} parent=1 // pred_check_branch
      %61 = sbr.rel (0) target = $region21
    $region20: #{tpu_custom_call.1} parent=1 // pred_region
      %62 = dma.done [#allocation3], 256
    $region21: #{tpu_custom_call.1} parent=1 // pred_fallthru
      _
    %63 = vsyncpa [#allocation3], 1

</llo_original>
